<compile_context>
chip_gen: v5e
topology: v5e:2x2
jax: 0.10.0
libtpu: 0.0.40
codegen_flags: <defaults>
</compile_context>

<pallas_src>
import jax
import jax.numpy as jnp
from jax import lax
from jax.experimental import pallas as pl
from jax.experimental.pallas import tpu as pltpu


def _linear_bias_kernel(x_ref, w_ref, b_ref, o_ref, acc_ref):
    """One (tm, tn) output tile, accumulated over the K grid axis (with bias)."""
    k = pl.program_id(2)

    @pl.when(k == 0)
    def _():
        acc_ref[...] = jnp.zeros_like(acc_ref)

    # NT matmul on the MXU: x (tm, tk) contracted with w (tn, tk) along K.
    acc_ref[...] += lax.dot_general(
        x_ref[...], w_ref[...],
        dimension_numbers=(((1,), (1,)), ((), ())),
        preferred_element_type=jnp.float32)

    @pl.when(k == pl.num_programs(2) - 1)
    def _():
        out = acc_ref[...] + b_ref[...].astype(jnp.float32)   # (tm,tn)+(1,tn)
        o_ref[...] = out.astype(o_ref.dtype)


def _linear_nobias_kernel(x_ref, w_ref, o_ref, acc_ref):
    """Same as above but without a bias operand."""
    k = pl.program_id(2)

    @pl.when(k == 0)
    def _():
        acc_ref[...] = jnp.zeros_like(acc_ref)

    acc_ref[...] += lax.dot_general(
        x_ref[...], w_ref[...],
        dimension_numbers=(((1,), (1,)), ((), ())),
        preferred_element_type=jnp.float32)

    @pl.when(k == pl.num_programs(2) - 1)
    def _():
        o_ref[...] = acc_ref[...].astype(o_ref.dtype)


def _round_up(x: int, m: int) -> int:
    return (x + m - 1) // m * m


def _pick_tile(size: int, desired: int, align: int) -> int:
    # Use the desired (large) tile when the dim is big enough, otherwise a
    # single aligned block covering the whole (padded) dim.
    return desired if size >= desired else _round_up(size, align)


def linear(x: jax.Array, weight: jax.Array, bias: jax.Array | None = None,
           *, tm: int = 256, tn: int = 256, tk: int = 512) -> jax.Array:
    """y = x @ weight.T + bias, weight shaped (out_features, in_features)."""
    *lead, K = x.shape
    N, K2 = weight.shape
    assert K == K2, f"in_features mismatch: x has {K}, weight has {K2}"

    M = 1
    for s in lead:
        M *= s
    x2d = x.reshape(M, K)

    itemsize = jnp.dtype(x.dtype).itemsize
    w_itemsize = jnp.dtype(weight.dtype).itemsize
    # dtype-aware sublane packing for the M tile (bf16 packs 16 rows / vreg).
    sublane = {4: 8, 2: 16, 1: 32}.get(itemsize, 8)

    # Tile selection (aligned to sublane/lane hardware tiling).
    tm_ = _pick_tile(M, tm, sublane)
    tn_ = _pick_tile(N, tn, 128)
    tk_ = _pick_tile(K, tk, 128)
    Mp, Np, Kp = _round_up(M, tm_), _round_up(N, tn_), _round_up(K, tk_)

    # Zero-pad to tile multiples (remainder handling without masked tiles).
    if (Mp, Kp) != (M, K):
        x2d = jnp.pad(x2d, ((0, Mp - M), (0, Kp - K)))
    w2d = weight
    if (Np, Kp) != (N, K):
        w2d = jnp.pad(w2d, ((0, Np - N), (0, Kp - K)))

    grid = (Mp // tm_, Np // tn_, Kp // tk_)

    # Explicit scoped-VMEM budget: double-buffered x/w/out tiles (+ bias) + acc,
    # with headroom, capped safely below v7x's 64 MiB physical VMEM.
    vmem_bytes = (2 * tm_ * tk_ * itemsize        # x tiles (double buffered)
                  + 2 * tn_ * tk_ * w_itemsize    # w tiles
                  + 2 * tm_ * tn_ * itemsize      # out tiles
                  + 2 * tn_ * 4                   # bias tiles
                  + tm_ * tn_ * 4)                # f32 accumulator scratch
    vmem_limit = min(2 * vmem_bytes + (8 << 20), 48 << 20)

    cost = pl.CostEstimate(
        flops=2 * M * N * K,
        transcendentals=0,
        bytes_accessed=(M * K * itemsize + K * N * w_itemsize
                        + M * N * itemsize + (N * 4 if bias is not None else 0)),
    )

    x_spec = pl.BlockSpec((tm_, tk_), lambda i, j, k: (i, k))      # x tile
    w_spec = pl.BlockSpec((tn_, tk_), lambda i, j, k: (j, k))      # w tile (N,K)
    o_spec = pl.BlockSpec((tm_, tn_), lambda i, j, k: (i, j))
    compiler_params = pltpu.CompilerParams(
        dimension_semantics=("parallel", "parallel", "arbitrary"),
        vmem_limit_bytes=vmem_limit,
    )

    if bias is not None:
        assert bias.shape == (N,)
        b2d = bias.reshape(1, N)
        if Np != N:
            b2d = jnp.pad(b2d, ((0, 0), (0, Np - N)))
        out = pl.pallas_call(
            _linear_bias_kernel,
            out_shape=jax.ShapeDtypeStruct((Mp, Np), x.dtype),
            grid_spec=pltpu.PrefetchScalarGridSpec(
                num_scalar_prefetch=0,
                grid=grid,
                in_specs=[x_spec, w_spec,
                          pl.BlockSpec((1, tn_), lambda i, j, k: (0, j))],
                out_specs=o_spec,
                scratch_shapes=[pltpu.VMEM((tm_, tn_), jnp.float32)],
            ),
            compiler_params=compiler_params,
            cost_estimate=cost,
        )(x2d, w2d, b2d)
    else:
        out = pl.pallas_call(
            _linear_nobias_kernel,
            out_shape=jax.ShapeDtypeStruct((Mp, Np), x.dtype),
            grid_spec=pltpu.PrefetchScalarGridSpec(
                num_scalar_prefetch=0,
                grid=grid,
                in_specs=[x_spec, w_spec],
                out_specs=o_spec,
                scratch_shapes=[pltpu.VMEM((tm_, tn_), jnp.float32)],
            ),
            compiler_params=compiler_params,
            cost_estimate=cost,
        )(x2d, w2d)

    return out[:M, :N].reshape(*lead, N)


if __name__ == "__main__":
    key = jax.random.PRNGKey(0)
    kx, kw, kb = jax.random.split(key, 3)

    # Small shapes consistent with the module: x is [batch, seq, in_features],
    # weight is [out_features, in_features] in bf16 (Linear.dtype), bias f32.
    batch, seq, in_features, out_features = 2, 8, 64, 96
    x = jax.random.normal(kx, (batch, seq, in_features),
                          dtype=jnp.float32).astype(jnp.bfloat16)
    weight = (0.05 * jax.random.normal(kw, (out_features, in_features),
                                       dtype=jnp.float32)).astype(jnp.bfloat16)
    bias = jax.random.normal(kb, (out_features,), dtype=jnp.float32)

    y = linear(x, weight, bias)
    y = jax.block_until_ready(y)

    # Pure-JAX reference of the forward semantics (F.linear with f32 accum).
    y_ref = (jnp.dot(x.astype(jnp.float32), weight.astype(jnp.float32).T)
             + bias).astype(x.dtype)
    assert y.shape == (batch, seq, out_features) and y.dtype == x.dtype
    assert jnp.allclose(y.astype(jnp.float32), y_ref.astype(jnp.float32),
                        atol=5e-2, rtol=5e-2)

    # Also exercise the bias=None path (register_parameter('bias', None)).
    y_nb = jax.block_until_ready(linear(x, weight, None))
    y_nb_ref = jnp.dot(x.astype(jnp.float32),
                       weight.astype(jnp.float32).T).astype(x.dtype)
    assert jnp.allclose(y_nb.astype(jnp.float32), y_nb_ref.astype(jnp.float32),
                        atol=5e-2, rtol=5e-2)

    print("KERNEL_OK")
</pallas_src>

<mosaic_0001>
module attributes {stable_mosaic.version = 11 : i64} {
  func.func @_linear_bias_kernel(%arg0: i32, %arg1: i32, %arg2: i32, %arg3: memref<16x128xbf16, #tpu.memory_space<vmem>>, %arg4: memref<128x128xbf16, #tpu.memory_space<vmem>>, %arg5: memref<1x128xf32, #tpu.memory_space<vmem>>, %arg6: memref<16x128xbf16, #tpu.memory_space<vmem>>, %arg7: memref<16x128xf32, #tpu.memory_space<vmem>>) attributes {dimension_semantics = [#tpu.dimension_semantics<parallel>, #tpu.dimension_semantics<parallel>, #tpu.dimension_semantics<arbitrary>], iteration_bounds = array<i64: 1, 1, 1>, scalar_prefetch = 0 : i64, scratch_operands = 1 : i64, tpu.core_type = #tpu.core_type<tc>, window_params = [{transform_indices = @transform_0, window_bounds = array<i64: 16, 128>}, {transform_indices = @transform_1, window_bounds = array<i64: 128, 128>}, {transform_indices = @transform_2, window_bounds = array<i64: 1, 128>}, {transform_indices = @transform_3, window_bounds = array<i64: 16, 128>}]} {
    %c0_i32 = arith.constant 0 : i32
    %0 = arith.cmpi eq, %arg2, %c0_i32 : i32
    %1 = arith.extui %0 : i1 to i32
    %c0_i32_0 = arith.constant 0 : i32
    %2 = arith.cmpi ne, %1, %c0_i32_0 : i32
    scf.if %2 {
      %cst_10 = arith.constant 0.000000e+00 : f32
      %12 = vector.broadcast %cst_10 : f32 to vector<16x128xf32>
      %c0_11 = arith.constant 0 : index
      %c0_12 = arith.constant 0 : index
      %13 = vector.load %arg7[%c0_11, %c0_12] : memref<16x128xf32, #tpu.memory_space<vmem>>, vector<16x128xf32>
      tpu.vector_store %arg7[%c0_11, %c0_12], %12 {strides = array<i32>} : memref<16x128xf32, #tpu.memory_space<vmem>>, vector<16x128xf32>,
    } else {
    }
    %c0 = arith.constant 0 : index
    %c0_1 = arith.constant 0 : index
    %3 = vector.load %arg7[%c0, %c0_1] : memref<16x128xf32, #tpu.memory_space<vmem>>, vector<16x128xf32>
    %c0_2 = arith.constant 0 : index
    %c0_3 = arith.constant 0 : index
    %4 = vector.load %arg3[%c0_2, %c0_3] : memref<16x128xbf16, #tpu.memory_space<vmem>>, vector<16x128xbf16>
    %c0_4 = arith.constant 0 : index
    %c0_5 = arith.constant 0 : index
    %5 = vector.load %arg4[%c0_4, %c0_5] : memref<128x128xbf16, #tpu.memory_space<vmem>>, vector<128x128xbf16>
    %cst = arith.constant dense<0.000000e+00> : vector<16x128xf32>
    %6 = tpu.matmul %4, %5, %cst {dimension_numbers = #tpu.dot_dimension_numbers<[1], [1], [0], [0], [0, 0, 1, 0], [], []>} : vector<16x128xbf16>, vector<128x128xbf16>, vector<16x128xf32> -> vector<16x128xf32>
    %7 = arith.addf %3, %6 : vector<16x128xf32>
    %c0_6 = arith.constant 0 : index
    %c0_7 = arith.constant 0 : index
    %8 = vector.load %arg7[%c0_6, %c0_7] : memref<16x128xf32, #tpu.memory_space<vmem>>, vector<16x128xf32>
    tpu.vector_store %arg7[%c0_6, %c0_7], %7 {strides = array<i32>} : memref<16x128xf32, #tpu.memory_space<vmem>>, vector<16x128xf32>,
    %c0_i32_8 = arith.constant 0 : i32
    %9 = arith.cmpi eq, %arg2, %c0_i32_8 : i32
    %10 = arith.extui %9 : i1 to i32
    %c0_i32_9 = arith.constant 0 : i32
    %11 = arith.cmpi ne, %10, %c0_i32_9 : i32
    scf.if %11 {
      %c0_10 = arith.constant 0 : index
      %c0_11 = arith.constant 0 : index
      %12 = vector.load %arg7[%c0_10, %c0_11] : memref<16x128xf32, #tpu.memory_space<vmem>>, vector<16x128xf32>
      %c0_12 = arith.constant 0 : index
      %c0_13 = arith.constant 0 : index
      %13 = vector.load %arg5[%c0_12, %c0_13] : memref<1x128xf32, #tpu.memory_space<vmem>>, vector<1x128xf32>
      %14 = vector.broadcast %13 : vector<1x128xf32> to vector<16x128xf32>
      %15 = arith.addf %12, %14 : vector<16x128xf32>
      %16 = arith.truncf %15 : vector<16x128xf32> to vector<16x128xbf16>
      %c0_14 = arith.constant 0 : index
      %c0_15 = arith.constant 0 : index
      %17 = vector.load %arg6[%c0_14, %c0_15] : memref<16x128xbf16, #tpu.memory_space<vmem>>, vector<16x128xbf16>
      tpu.vector_store %arg6[%c0_14, %c0_15], %16 {strides = array<i32>} : memref<16x128xbf16, #tpu.memory_space<vmem>>, vector<16x128xbf16>,
    } else {
    }
    return
  }
  func.func @transform_0(%arg0: i32, %arg1: i32, %arg2: i32) -> (i32, i32) {
    %c0_i32 = arith.constant 0 : i32
    return %arg0, %arg2 : i32, i32
  }
  func.func @transform_1(%arg0: i32, %arg1: i32, %arg2: i32) -> (i32, i32) {
    %c0_i32 = arith.constant 0 : i32
    return %arg1, %arg2 : i32, i32
  }
  func.func @transform_2(%arg0: i32, %arg1: i32, %arg2: i32) -> (i32, i32) {
    %c0_i32 = arith.constant 0 : i32
    %c0_i32_0 = arith.constant 0 : i32
    return %c0_i32, %arg1 : i32, i32
  }
  func.func @transform_3(%arg0: i32, %arg1: i32, %arg2: i32) -> (i32, i32) {
    %c0_i32 = arith.constant 0 : i32
    return %arg0, %arg1 : i32, i32
  }
}

</mosaic_0001>

<llo_original>
// kernel: tpu_custom_call.1
$region0: #{tpu_custom_call.1}
  #allocation0 [shape = 'u32[]', space=smem, size = 0x4, offset = 0x4, fixed_abs, tag = 'smem constant byte address 0x4 - core index']
  #allocation1 [shape = 'u32[72,128]{1,0:T(1,128)}', space=vmem, size = 0x9000, scoped, tag = 'internal scratch']
  #allocation2 [shape = 'f32[16,128]{1,0:T(8,128)}', space=vmem, size = 0x2000, scoped, tag = 'scratch operand']
  %s0 = inlined_call_operand.hbm [shape: bf16[16,128], index: 0, kind: input, shape index: {}]
  %s1 = inlined_call_operand.hbm [shape: bf16[128,128], index: 1, kind: input, shape index: {}]
  %s2 = inlined_call_operand.vmem [shape: f32[1,128], index: 2, kind: input, shape index: {}]
  %s3 = inlined_call_operand.hbm [shape: bf16[16,128], index: 3, kind: output, shape index: {}]
  %s4 = sld [smem:[#allocation0]]
  $region38: #{tpu_custom_call.1} parent=0
    _
  %s6 = ssub.s32 1, %s4
  %s7 = scalar_select 0, %s6, %s4
  $region1: #{tpu_custom_call.1} parent=0
    #allocation3 [shape = 'u8[4096]{0}', space=vmem, size = 0x1000, scoped, tag = 'input window, operand 0, single buffered']
    #allocation4 [shape = 's32[1]{0}', space=sflag, size = 0x4, scoped, tag = 'scoped memory for tpu_custom_call.1']
    #allocation5 [shape = 's32[1]{0}', space=sflag, size = 0x4, scoped, tag = 'scoped memory for tpu_custom_call.1']
    #allocation6 [shape = 'u8[32768]{0}', space=vmem, size = 0x8000, scoped, tag = 'input window, operand 1, single buffered']
    #allocation7 [shape = 's32[1]{0}', space=sflag, size = 0x4, scoped, tag = 'scoped memory for tpu_custom_call.1']
    #allocation8 [shape = 'u8[4096]{0}', space=vmem, size = 0x1000, scoped, tag = 'output window, operand 0, single buffered']
    %8 = vsyncpa [#allocation4], 0
    %9 = vsyncpa [#allocation7], 0
    %10 = vsyncpa [#allocation5], 0
    // Predicated region
    $region2: #{tpu_custom_call.1} parent=1 // pred_check
      _
    $region3: #{tpu_custom_call.1} parent=1 // pred_check_branch
      %12 = sbr.rel (0) target = $region5
    $region4: #{tpu_custom_call.1} parent=1 // pred_region
      %14 = vsyncadd [#allocation4], 0
      %s15 = sshll.u32 %s0, 4
      %s16 = int_to_ptr.hbm [resolvable:$true] %s15
      %s17 = sshll.u32 [#allocation3], 4
      %s18 = int_to_ptr.vmem [resolvable:$true] %s17
      %23 = dma.hbm_to_vmem [thread:$0]  %s16, 128, %s18, [#allocation4], 64, 64, 4
    $region5: #{tpu_custom_call.1} parent=1 // pred_fallthru
      _
    // Predicated region
    $region6: #{tpu_custom_call.1} parent=1 // pred_check
      _
    $region7: #{tpu_custom_call.1} parent=1 // pred_check_branch
      %25 = sbr.rel (0) target = $region9
    $region8: #{tpu_custom_call.1} parent=1 // pred_region
      %27 = vsyncadd [#allocation7], 0
      %s28 = sshll.u32 %s1, 4
      %s29 = int_to_ptr.hbm [resolvable:$true] %s28
      %s30 = sshll.u32 [#allocation6], 4
      %s31 = int_to_ptr.vmem [resolvable:$true] %s30
      %36 = dma.hbm_to_vmem [thread:$0]  %s29, 1024, %s31, [#allocation7], 64, 64, 4
    $region9: #{tpu_custom_call.1} parent=1 // pred_fallthru
      _
    // Predicated region
    $region10: #{tpu_custom_call.1} parent=1 // pred_check
      _
    $region11: #{tpu_custom_call.1} parent=1 // pred_check_branch
      %38 = sbr.rel (0) target = $region13
    $region12: #{tpu_custom_call.1} parent=1 // pred_region
      _
    $region13: #{tpu_custom_call.1} parent=1 // pred_fallthru
      _
    // Predicated region
    $region14: #{tpu_custom_call.1} parent=1 // pred_check
      _
    $region15: #{tpu_custom_call.1} parent=1 // pred_check_branch
      %40 = sbr.rel (0) target = $region17
    $region16: #{tpu_custom_call.1} parent=1 // pred_region
      %42 = dma.done [#allocation4], 128
    $region17: #{tpu_custom_call.1} parent=1 // pred_fallthru
      _
    // Predicated region
    $region18: #{tpu_custom_call.1} parent=1 // pred_check
      _
    $region19: #{tpu_custom_call.1} parent=1 // pred_check_branch
      %44 = sbr.rel (0) target = $region21
    $region20: #{tpu_custom_call.1} parent=1 // pred_region
      %46 = dma.done [#allocation7], 1024
    $region21: #{tpu_custom_call.1} parent=1 // pred_fallthru
      _
    %p47 = scmp.eq.s32.totalorder 0, 0
    // Predicated region
    $region22: #{tpu_custom_call.1} parent=1 // pred_check
      %p48 = pneg %p47
    $region23: #{tpu_custom_call.1} parent=1 // pred_check_branch
      %50 = sbr.rel (%p48) target = $region25
    $region24: #{tpu_custom_call.1} parent=1 // pred_region
      %51 = vst [vmem:[#allocation2] sm:$0xff] 0.0
      %52 = vst [vmem:[#allocation2 + $0x8] sm:$0xff] 0.0
    $region25: #{tpu_custom_call.1} parent=1 // pred_fallthru
      _
    %v53 = vld [vmem:[#allocation2] sm:$0xff]
    %v54 = vld [vmem:[#allocation2 + $0x8] sm:$0xff]
    %v55 = vld [vmem:[#allocation3] sm:$0xf]
    %v56 = vld [vmem:[#allocation3 + $0x4] sm:$0xf]
    %v57 = vld [vmem:[#allocation6] sm:$0xf]
    %v58 = vld [vmem:[#allocation6 + $0x4] sm:$0xf]
    %v59 = vld [vmem:[#allocation6 + $0x8] sm:$0xf]
    %v60 = vld [vmem:[#allocation6 + $0xc] sm:$0xf]
    %v61 = vld [vmem:[#allocation6 + $0x10] sm:$0xf]
    %v62 = vld [vmem:[#allocation6 + $0x14] sm:$0xf]
    %v63 = vld [vmem:[#allocation6 + $0x18] sm:$0xf]
    %v64 = vld [vmem:[#allocation6 + $0x1c] sm:$0xf]
    %v65 = vld [vmem:[#allocation6 + $0x20] sm:$0xf]
    %v66 = vld [vmem:[#allocation6 + $0x24] sm:$0xf]
    %v67 = vld [vmem:[#allocation6 + $0x28] sm:$0xf]
    %v68 = vld [vmem:[#allocation6 + $0x2c] sm:$0xf]
    %v69 = vld [vmem:[#allocation6 + $0x30] sm:$0xf]
    %v70 = vld [vmem:[#allocation6 + $0x34] sm:$0xf]
    %v71 = vld [vmem:[#allocation6 + $0x38] sm:$0xf]
    %v72 = vld [vmem:[#allocation6 + $0x3c] sm:$0xf]
    %v75 = vunpack.c.l.b16 %v55
    %v76 = vunpack.c.l.b16 %v56
    %v77 = vpack.c.b16 %v76, %v75
    %v95 = vunpack.c.l.b16 %v57
    %v96 = vunpack.c.l.b16 %v58
    %v97 = vunpack.c.l.b16 %v59
    %v98 = vunpack.c.l.b16 %v60
    %v99 = vunpack.c.l.b16 %v61
    %v100 = vunpack.c.l.b16 %v62
    %v101 = vunpack.c.l.b16 %v63
    %v102 = vunpack.c.l.b16 %v64
    %v103 = vunpack.c.l.b16 %v65
    %v104 = vunpack.c.l.b16 %v66
    %v105 = vunpack.c.l.b16 %v67
    %v106 = vunpack.c.l.b16 %v68
    %v107 = vunpack.c.l.b16 %v69
    %v108 = vunpack.c.l.b16 %v70
    %v109 = vunpack.c.l.b16 %v71
    %v110 = vunpack.c.l.b16 %v72
    %v111 = vpack.c.b16 %v96, %v95
    %v112 = vpack.c.b16 %v98, %v97
    %v113 = vpack.c.b16 %v100, %v99
    %v114 = vpack.c.b16 %v102, %v101
    %v115 = vpack.c.b16 %v104, %v103
    %v116 = vpack.c.b16 %v106, %v105
    %v117 = vpack.c.b16 %v108, %v107
    %v118 = vpack.c.b16 %v110, %v109
    %127 = vmatpush.bf16.xpose.msra.mxu0 %v118
    %128 = vmatpush.bf16.xpose.msra.mxu0 %v117
    %129 = vmatpush.bf16.xpose.msra.mxu0 %v116
    %130 = vmatpush.bf16.xpose.msra.mxu0 %v115
    %131 = vmatpush.bf16.xpose.msra.mxu0 %v114
    %132 = vmatpush.bf16.xpose.msra.mxu0 %v113
    %133 = vmatpush.bf16.xpose.msra.mxu0 %v112
    %134 = vmatpush.bf16.xpose.msra.mxu0 %v111
    %135 = vmatmul.bf16.gmra.mxu0 %v77
    %v136 = vpop.f32.mrf.mxu0
    %v137 = vadd.f32 0.0, %v136
    %v138 = vpop.f32.mrf.mxu0
    %v139 = vadd.f32 0.0, %v138
    %140 = vdwg.mxu0
    %v141 = vadd.f32 %v53, %v137
    %v142 = vadd.f32 %v54, %v139
    %143 = vst [vmem:[#allocation2] sm:$0xff] %v141
    %144 = vst [vmem:[#allocation2 + $0x8] sm:$0xff] %v142
    // Predicated region
    $region26: #{tpu_custom_call.1} parent=1 // pred_check
      %p145 = pneg %p47
    $region27: #{tpu_custom_call.1} parent=1 // pred_check_branch
      %147 = sbr.rel (%p145) target = $region29
    $region28: #{tpu_custom_call.1} parent=1 // pred_region
      %v148 = vld [vmem:[#allocation2] sm:$0xff]
      %v149 = vld [vmem:[#allocation2 + $0x8] sm:$0xff]
      %v150 = vld [vmem:[%s2] sm:$0x1]
      %v152 = vperm.slane %v150, 0
      %v154 = vadd.f32 %v148, %v152
      %v155 = vadd.f32 %v149, %v152
      %v156 = vpack.c.bf16 %v154, %v154
      %v157 = vpack.c.bf16 %v155, %v155
      %158 = vst [vmem:[#allocation8] sm:$0xf] %v156
      %159 = vst [vmem:[#allocation8 + $0x4] sm:$0xf] %v157
    $region29: #{tpu_custom_call.1} parent=1 // pred_fallthru
      _
    // Predicated region
    $region30: #{tpu_custom_call.1} parent=1 // pred_check
      _
    $region31: #{tpu_custom_call.1} parent=1 // pred_check_branch
      %161 = sbr.rel (0) target = $region33
    $region32: #{tpu_custom_call.1} parent=1 // pred_region
      %163 = vsyncadd [#allocation5], 0
      %s164 = sshll.u32 [#allocation8], 4
      %s165 = int_to_ptr.vmem [resolvable:$true] %s164
      %s166 = sshll.u32 %s3, 4
      %s167 = int_to_ptr.hbm [resolvable:$true] %s166
      %172 = dma.vmem_to_hbm [thread:$0]  %s165, 128, %s167, [#allocation5], 64, 64, 4
    $region33: #{tpu_custom_call.1} parent=1 // pred_fallthru
      _
    // Predicated region
    $region34: #{tpu_custom_call.1} parent=1 // pred_check
      _
    $region35: #{tpu_custom_call.1} parent=1 // pred_check_branch
      %174 = sbr.rel (0) target = $region37
    $region36: #{tpu_custom_call.1} parent=1 // pred_region
      %176 = dma.done [#allocation5], 128
    $region37: #{tpu_custom_call.1} parent=1 // pred_fallthru
      _
    %177 = vsyncpa [#allocation4], 1
    %178 = vsyncpa [#allocation7], 1
    %179 = vsyncpa [#allocation5], 1

</llo_original>
